<compile_context>
chip_gen: v7x
topology: tpu7x:2x2x1
jax: 0.10.0
libtpu: 0.0.40
codegen_flags: <defaults>
</compile_context>

<pallas_src>
import jax
import jax.numpy as jnp
from jax.experimental import pallas as pl
from jax.experimental.pallas import tpu as pltpu


def _round_down(v, m):
    return (v // m) * m


def _make_kernel(R, TP, LANES, JB, P, needs_mask, assume_binary_targets):
    nfold = TP // LANES

    def fold(v):
        # (R, TP) -> (R, LANES) via lane-group adds (pure VPU, tile-aligned slices).
        acc = v[:, 0:LANES]
        for k in range(1, nfold):
            acc = acc + v[:, k * LANES:(k + 1) * LANES]
        return acc

    def kernel(x_ref, t_ref, out_ref):
        j = pl.program_id(1)

        @pl.when(j == 0)
        def _init():
            out_ref[...] = jnp.zeros_like(out_ref)

        x = x_ref[...].astype(jnp.float32)
        t = t_ref[...].astype(jnp.float32)

        if needs_mask:
            s = pl.program_id(0)
            col0 = (s * JB + j) * TP
            lane = jax.lax.broadcasted_iota(jnp.int32, (R, TP), 1)
            mask = (lane + col0) < P
            t = jnp.where(mask, t, 0.0)
            x_log = jnp.where(mask, x, 0.5)      # keep log() finite in padding
            x = jnp.where(mask, x, 0.0)
        else:
            x_log = x

        if assume_binary_targets:
            # t in {0,1}: single transcendental per element (EUP relief).
            picked = jnp.where(t > 0.5, x_log, 1.0 - x_log)
            bce = -jnp.maximum(jnp.log(picked), -100.0)
        else:
            # == -(t*log(x) + (1-t)*log(1-x)) with PyTorch's clamp at -100,
            # rewritten to save one multiply per element.
            log_x = jnp.maximum(jnp.log(x_log), -100.0)
            log_1mx = jnp.maximum(jnp.log(1.0 - x_log), -100.0)
            bce = -(log_1mx + t * (log_x - log_1mx))
        if needs_mask:
            bce = jnp.where(mask, bce, 0.0)

        inter = x * t

        # out_ref block: (4, R, LANES) -> [bce, x*t, x, t] lane-wise partial sums.
        out_ref[0] += fold(bce)
        out_ref[1] += fold(inter)
        out_ref[2] += fold(x)
        out_ref[3] += fold(t)

    return kernel


def multiclass_dice_loss(pred_nchw, target_nchw, weight=None,
                         assume_binary_targets=False):
    """Pallas-TPU equivalent of MulticlassDiceLoss.forward(input, target), NCHW inputs."""
    if pred_nchw.dtype not in (jnp.float32, jnp.bfloat16, jnp.float16):
        pred_nchw = pred_nchw.astype(jnp.float32)
    if target_nchw.dtype not in (jnp.float32, jnp.bfloat16, jnp.float16):
        target_nchw = target_nchw.astype(jnp.float32)

    N, C, H, W = pred_nchw.shape
    R = N * C
    P = H * W

    # Contiguous reshape only (no transpose, no HBM copy).
    x = pred_nchw.reshape(R, P)
    t = target_nchw.reshape(R, P)

    # ---- tiling choice: TP lanes per block, ~<=1-2 MiB per input tile ----
    if P >= 512:
        budget_cols = max(512, _round_down((1 << 20) // (R * 4), 512))
        TP = min(budget_cols, _round_down(P, 512))
        LANES = 512
    elif P >= 128:
        TP = _round_down(P, 128)
        LANES = TP
    else:
        TP = P
        LANES = P

    NCB = -(-P // TP)                  # number of pixel blocks
    NSPLIT = 2 if NCB >= 2 else 1      # parallel axis (both v7x TensorCores)
    JB = -(-NCB // NSPLIT)             # pixel blocks per parallel split
    needs_mask = (NSPLIT * JB * TP != P)
    clamp = (NSPLIT * JB != NCB)

    def in_index(s, j):
        cb = s * JB + j
        if clamp:
            cb = jnp.minimum(cb, NCB - 1)   # kernel mask zeroes the duplicate read
        return (0, cb)

    kernel = _make_kernel(R, TP, LANES, JB, P, needs_mask, assume_binary_targets)

    out = pl.pallas_call(
        kernel,
        grid=(NSPLIT, JB),
        out_shape=jax.ShapeDtypeStruct((NSPLIT * 4, R, LANES), jnp.float32),
        in_specs=[
            pl.BlockSpec((R, TP), in_index),
            pl.BlockSpec((R, TP), in_index),
        ],
        out_specs=pl.BlockSpec((4, R, LANES), lambda s, j: (s, 0, 0)),
        compiler_params=pltpu.CompilerParams(
            dimension_semantics=("parallel", "arbitrary"),
            vmem_limit_bytes=32 * 1024 * 1024,
        ),
    )(x, t)

    # Tiny epilogue: O(NSPLIT*4*R*LANES) elements.
    sums = out.reshape(NSPLIT, 4, R, LANES).sum(axis=(0, 3))      # (4, R)
    ce = sums[0].sum() / (R * P)                                   # BCE 'mean'
    inter_c = sums[1].reshape(N, C).sum(axis=0)
    xsum_c = sums[2].reshape(N, C).sum(axis=0)
    tsum_c = sums[3].reshape(N, C).sum(axis=0)
    dice_c = 1.0 - (2.0 * inter_c + 1.0) / (xsum_c + tsum_c + 1.0)
    dice = dice_c.sum()

    if weight is None:
        return ce + dice
    # Matches the PyTorch module: scalar scaling of the class-summed dice.
    return ce + dice * weight


if __name__ == "__main__":
    key = jax.random.PRNGKey(0)
    k1, k2 = jax.random.split(key)

    N, C, H, W = 2, 4, 16, 16

    # predictions in (0, 1) (as expected by BCELoss)
    pred = jax.nn.sigmoid(jax.random.normal(k1, (N, C, H, W), dtype=jnp.float32))

    # one-hot targets along the class axis (typical multiclass segmentation)
    labels = jax.random.randint(k2, (N, H, W), 0, C)
    target = jnp.transpose(jax.nn.one_hot(labels, C, dtype=jnp.float32), (0, 3, 1, 2))

    loss = jax.block_until_ready(multiclass_dice_loss(pred, target))
    loss_bin = jax.block_until_ready(
        multiclass_dice_loss(pred, target, assume_binary_targets=True))

    # pure-JAX reference of the PyTorch math
    def ref(pred, tgt):
        xr = jnp.transpose(pred, (0, 2, 3, 1)).reshape(-1, C)
        tr = jnp.transpose(tgt, (0, 2, 3, 1)).reshape(-1, C)
        ce = jnp.mean(-(tr * jnp.maximum(jnp.log(xr), -100.0)
                        + (1 - tr) * jnp.maximum(jnp.log(1 - xr), -100.0)))
        dice = 0.0
        for i in range(C):
            xi, ti = xr[:, i], tr[:, i]
            dice += 1.0 - (2.0 * jnp.sum(xi * ti) + 1.0) / (jnp.sum(xi) + jnp.sum(ti) + 1.0)
        return ce + dice

    expected = ref(pred, target)
    assert jnp.allclose(loss, expected, rtol=1e-5, atol=1e-5), (loss, expected)
    assert jnp.allclose(loss_bin, expected, rtol=1e-5, atol=1e-5), (loss_bin, expected)
    print("KERNEL_OK")
</pallas_src>

<mosaic_0001>
module attributes {stable_mosaic.version = 11 : i64} {
  func.func @kernel(%arg0: i32, %arg1: i32, %arg2: memref<8x256xf32, #tpu.memory_space<vmem>>, %arg3: memref<8x256xf32, #tpu.memory_space<vmem>>, %arg4: memref<4x8x256xf32, #tpu.memory_space<vmem>>) attributes {dimension_semantics = [#tpu.dimension_semantics<parallel>, #tpu.dimension_semantics<arbitrary>], iteration_bounds = array<i64: 1, 1>, scalar_prefetch = 0 : i64, scratch_operands = 0 : i64, tpu.core_type = #tpu.core_type<tc>, window_params = [{transform_indices = @transform_0, window_bounds = array<i64: 8, 256>}, {transform_indices = @transform_1, window_bounds = array<i64: 8, 256>}, {transform_indices = @transform_2, window_bounds = array<i64: 4, 8, 256>}]} {
    %c0_i32 = arith.constant 0 : i32
    %0 = arith.cmpi eq, %arg1, %c0_i32 : i32
    %1 = arith.extui %0 : i1 to i32
    %c0_i32_0 = arith.constant 0 : i32
    %2 = arith.cmpi ne, %1, %c0_i32_0 : i32
    scf.if %2 {
      %cst_28 = arith.constant 0.000000e+00 : f32
      %43 = vector.broadcast %cst_28 : f32 to vector<4x8x256xf32>
      %c0_29 = arith.constant 0 : index
      %c0_30 = arith.constant 0 : index
      %c0_31 = arith.constant 0 : index
      %44 = vector.load %arg4[%c0_29, %c0_30, %c0_31] : memref<4x8x256xf32, #tpu.memory_space<vmem>>, vector<4x8x256xf32>
      tpu.vector_store %arg4[%c0_29, %c0_30, %c0_31], %43 {strides = array<i32>} : memref<4x8x256xf32, #tpu.memory_space<vmem>>, vector<4x8x256xf32>,
    } else {
    }
    %c0 = arith.constant 0 : index
    %c0_1 = arith.constant 0 : index
    %3 = vector.load %arg2[%c0, %c0_1] : memref<8x256xf32, #tpu.memory_space<vmem>>, vector<8x256xf32>
    %c0_2 = arith.constant 0 : index
    %c0_3 = arith.constant 0 : index
    %4 = vector.load %arg3[%c0_2, %c0_3] : memref<8x256xf32, #tpu.memory_space<vmem>>, vector<8x256xf32>
    %5 = math.log %3 : vector<8x256xf32>
    %cst = arith.constant -1.000000e+02 : f32
    %6 = vector.broadcast %cst : f32 to vector<8x256xf32>
    %7 = arith.maximumf %5, %6 : vector<8x256xf32>
    %cst_4 = arith.constant 1.000000e+00 : f32
    %8 = vector.broadcast %cst_4 : f32 to vector<8x256xf32>
    %9 = arith.subf %8, %3 : vector<8x256xf32>
    %10 = math.log %9 : vector<8x256xf32>
    %cst_5 = arith.constant -1.000000e+02 : f32
    %11 = vector.broadcast %cst_5 : f32 to vector<8x256xf32>
    %12 = arith.maximumf %10, %11 : vector<8x256xf32>
    %13 = arith.subf %7, %12 : vector<8x256xf32>
    %14 = arith.mulf %4, %13 : vector<8x256xf32>
    %15 = arith.addf %12, %14 : vector<8x256xf32>
    %cst_6 = arith.constant 0.000000e+00 : f32
    %16 = vector.broadcast %cst_6 : f32 to vector<8x256xf32>
    %17 = arith.subf %16, %15 : vector<8x256xf32>
    %18 = arith.mulf %3, %4 : vector<8x256xf32>
    %c0_7 = arith.constant 0 : index
    %c0_8 = arith.constant 0 : index
    %c0_9 = arith.constant 0 : index
    %19 = vector.load %arg4[%c0_7, %c0_8, %c0_9] : memref<4x8x256xf32, #tpu.memory_space<vmem>>, vector<1x8x256xf32>
    %20 = vector.shape_cast %19 : vector<1x8x256xf32> to vector<8x256xf32>
    %21 = arith.addf %20, %17 : vector<8x256xf32>
    %c0_10 = arith.constant 0 : index
    %c0_11 = arith.constant 0 : index
    %c0_12 = arith.constant 0 : index
    %22 = vector.load %arg4[%c0_10, %c0_11, %c0_12] : memref<4x8x256xf32, #tpu.memory_space<vmem>>, vector<1x8x256xf32>
    %23 = vector.shape_cast %22 : vector<1x8x256xf32> to vector<8x256xf32>
    %24 = vector.shape_cast %21 : vector<8x256xf32> to vector<1x8x256xf32>
    tpu.vector_store %arg4[%c0_10, %c0_11, %c0_12], %24 {strides = array<i32>} : memref<4x8x256xf32, #tpu.memory_space<vmem>>, vector<1x8x256xf32>,
    %c1 = arith.constant 1 : index
    %c0_13 = arith.constant 0 : index
    %c0_14 = arith.constant 0 : index
    %25 = vector.load %arg4[%c1, %c0_13, %c0_14] : memref<4x8x256xf32, #tpu.memory_space<vmem>>, vector<1x8x256xf32>
    %26 = vector.shape_cast %25 : vector<1x8x256xf32> to vector<8x256xf32>
    %27 = arith.addf %26, %18 : vector<8x256xf32>
    %c1_15 = arith.constant 1 : index
    %c0_16 = arith.constant 0 : index
    %c0_17 = arith.constant 0 : index
    %28 = vector.load %arg4[%c1_15, %c0_16, %c0_17] : memref<4x8x256xf32, #tpu.memory_space<vmem>>, vector<1x8x256xf32>
    %29 = vector.shape_cast %28 : vector<1x8x256xf32> to vector<8x256xf32>
    %30 = vector.shape_cast %27 : vector<8x256xf32> to vector<1x8x256xf32>
    tpu.vector_store %arg4[%c1_15, %c0_16, %c0_17], %30 {strides = array<i32>} : memref<4x8x256xf32, #tpu.memory_space<vmem>>, vector<1x8x256xf32>,
    %c2 = arith.constant 2 : index
    %c0_18 = arith.constant 0 : index
    %c0_19 = arith.constant 0 : index
    %31 = vector.load %arg4[%c2, %c0_18, %c0_19] : memref<4x8x256xf32, #tpu.memory_space<vmem>>, vector<1x8x256xf32>
    %32 = vector.shape_cast %31 : vector<1x8x256xf32> to vector<8x256xf32>
    %33 = arith.addf %32, %3 : vector<8x256xf32>
    %c2_20 = arith.constant 2 : index
    %c0_21 = arith.constant 0 : index
    %c0_22 = arith.constant 0 : index
    %34 = vector.load %arg4[%c2_20, %c0_21, %c0_22] : memref<4x8x256xf32, #tpu.memory_space<vmem>>, vector<1x8x256xf32>
    %35 = vector.shape_cast %34 : vector<1x8x256xf32> to vector<8x256xf32>
    %36 = vector.shape_cast %33 : vector<8x256xf32> to vector<1x8x256xf32>
    tpu.vector_store %arg4[%c2_20, %c0_21, %c0_22], %36 {strides = array<i32>} : memref<4x8x256xf32, #tpu.memory_space<vmem>>, vector<1x8x256xf32>,
    %c3 = arith.constant 3 : index
    %c0_23 = arith.constant 0 : index
    %c0_24 = arith.constant 0 : index
    %37 = vector.load %arg4[%c3, %c0_23, %c0_24] : memref<4x8x256xf32, #tpu.memory_space<vmem>>, vector<1x8x256xf32>
    %38 = vector.shape_cast %37 : vector<1x8x256xf32> to vector<8x256xf32>
    %39 = arith.addf %38, %4 : vector<8x256xf32>
    %c3_25 = arith.constant 3 : index
    %c0_26 = arith.constant 0 : index
    %c0_27 = arith.constant 0 : index
    %40 = vector.load %arg4[%c3_25, %c0_26, %c0_27] : memref<4x8x256xf32, #tpu.memory_space<vmem>>, vector<1x8x256xf32>
    %41 = vector.shape_cast %40 : vector<1x8x256xf32> to vector<8x256xf32>
    %42 = vector.shape_cast %39 : vector<8x256xf32> to vector<1x8x256xf32>
    tpu.vector_store %arg4[%c3_25, %c0_26, %c0_27], %42 {strides = array<i32>} : memref<4x8x256xf32, #tpu.memory_space<vmem>>, vector<1x8x256xf32>,
    return
  }
  func.func @transform_0(%arg0: i32, %arg1: i32) -> (i32, i32) {
    %c1_i32 = arith.constant 1 : i32
    %0 = arith.muli %arg0, %c1_i32 : i32
    %1 = arith.addi %0, %arg1 : i32
    %c0_i32 = arith.constant 0 : i32
    %c0_i32_0 = arith.constant 0 : i32
    return %c0_i32, %1 : i32, i32
  }
  func.func @transform_1(%arg0: i32, %arg1: i32) -> (i32, i32) {
    %c1_i32 = arith.constant 1 : i32
    %0 = arith.muli %arg0, %c1_i32 : i32
    %1 = arith.addi %0, %arg1 : i32
    %c0_i32 = arith.constant 0 : i32
    %c0_i32_0 = arith.constant 0 : i32
    return %c0_i32, %1 : i32, i32
  }
  func.func @transform_2(%arg0: i32, %arg1: i32) -> (i32, i32, i32) {
    %c0_i32 = arith.constant 0 : i32
    %c0_i32_0 = arith.constant 0 : i32
    %c0_i32_1 = arith.constant 0 : i32
    return %arg0, %c0_i32, %c0_i32_0 : i32, i32, i32
  }
}

</mosaic_0001>

<llo_original>
// kernel: tpu_custom_call.1
$region0: #{tpu_custom_call.1}
  #allocation0 [shape = 'u32[]', space=smem, size = 0x4, offset = 0x4, fixed_abs, tag = 'smem constant byte address 0x4 - core index']
  #allocation1 [shape = 'u32[144,128]{1,0:T(1,128)}', space=vmem, size = 0x12000, scoped, tag = 'internal scratch']
  %s0 = inlined_call_operand.hbm [shape: f32[8,256], index: 0, kind: input, shape index: {}]
  %s1 = inlined_call_operand.hbm [shape: f32[8,256], index: 1, kind: input, shape index: {}]
  %s2 = inlined_call_operand.hbm [shape: f32[4,8,256], index: 2, kind: output, shape index: {}]
  %s3 = sld [smem:[#allocation0]]
  $region30: #{tpu_custom_call.1} parent=0
    _
  %s5 = ssub.s32 1, %s3
  %s6 = scalar_select 0, %s5, %s3
  $region1: #{tpu_custom_call.1} parent=0
    #allocation2 [shape = 'u8[8192]{0}', space=vmem, size = 0x2000, scoped, tag = 'input window, operand 0, single buffered']
    #allocation3 [shape = 's32[1]{0}', space=sflag, size = 0x4, scoped, tag = 'scoped memory for tpu_custom_call.1']
    #allocation4 [shape = 's32[1]{0}', space=sflag, size = 0x4, scoped, tag = 'scoped memory for tpu_custom_call.1']
    #allocation5 [shape = 'u8[8192]{0}', space=vmem, size = 0x2000, scoped, tag = 'input window, operand 1, single buffered']
    #allocation6 [shape = 's32[1]{0}', space=sflag, size = 0x4, scoped, tag = 'scoped memory for tpu_custom_call.1']
    #allocation7 [shape = 'u8[32768]{0}', space=vmem, size = 0x8000, scoped, tag = 'output window, operand 0, single buffered']
    %7 = vsyncpa [#allocation3], 0
    %8 = vsyncpa [#allocation6], 0
    %9 = vsyncpa [#allocation4], 0
    // Predicated region
    $region2: #{tpu_custom_call.1} parent=1 // pred_check
      _
    $region3: #{tpu_custom_call.1} parent=1 // pred_check_branch
      %11 = sbr.rel (0) target = $region5
    $region4: #{tpu_custom_call.1} parent=1 // pred_region
      %s12 = sadd.s32 0, 0
      %s13 = smul.u32 2, %s12
      %s15 = ssub.s32 256, 256
      %16 = vsyncadd [#allocation3], %s15
      %s17 = smul.addr %s13, 128
      %s18 = scalar_lea.hbm %s0, %s17
      %s20 = sshll.u32 [#allocation2], 4
      %s21 = int_to_ptr.vmem [resolvable:$true] %s20
      %23 = dma.hbm_to_vmem [thread:$0]  %s18, 256, %s21, [#allocation3]
    $region5: #{tpu_custom_call.1} parent=1 // pred_fallthru
      _
    // Predicated region
    $region6: #{tpu_custom_call.1} parent=1 // pred_check
      _
    $region7: #{tpu_custom_call.1} parent=1 // pred_check_branch
      %25 = sbr.rel (0) target = $region9
    $region8: #{tpu_custom_call.1} parent=1 // pred_region
      %s26 = sadd.s32 0, 0
      %s27 = smul.u32 2, %s26
      %s29 = ssub.s32 256, 256
      %30 = vsyncadd [#allocation6], %s29
      %s31 = smul.addr %s27, 128
      %s32 = scalar_lea.hbm %s1, %s31
      %s34 = sshll.u32 [#allocation5], 4
      %s35 = int_to_ptr.vmem [resolvable:$true] %s34
      %37 = dma.hbm_to_vmem [thread:$0]  %s32, 256, %s35, [#allocation6]
    $region9: #{tpu_custom_call.1} parent=1 // pred_fallthru
      _
    // Predicated region
    $region10: #{tpu_custom_call.1} parent=1 // pred_check
      _
    $region11: #{tpu_custom_call.1} parent=1 // pred_check_branch
      %39 = sbr.rel (0) target = $region13
    $region12: #{tpu_custom_call.1} parent=1 // pred_region
      %40 = dma.done [#allocation3], 256
    $region13: #{tpu_custom_call.1} parent=1 // pred_fallthru
      _
    // Predicated region
    $region14: #{tpu_custom_call.1} parent=1 // pred_check
      _
    $region15: #{tpu_custom_call.1} parent=1 // pred_check_branch
      %42 = sbr.rel (0) target = $region17
    $region16: #{tpu_custom_call.1} parent=1 // pred_region
      %43 = dma.done [#allocation6], 256
    $region17: #{tpu_custom_call.1} parent=1 // pred_fallthru
      _
    %s44 = sadd.s32 0, 0
    %s45 = smul.u32 2, %s44
    %s46 = sadd.s32 0, 0
    %s47 = smul.u32 2, %s46
    %p48 = scmp.eq.s32.totalorder 0, 0
    // Predicated region
    $region18: #{tpu_custom_call.1} parent=1 // pred_check
      %p49 = pneg %p48
    $region19: #{tpu_custom_call.1} parent=1 // pred_check_branch
      %51 = sbr.rel (%p49) target = $region21
    $region20: #{tpu_custom_call.1} parent=1 // pred_region
      %52 = vst [vmem:[#allocation7] sm:$0xff] 0.0
      %53 = vst [vmem:[#allocation7 + $0x8] sm:$0xff] 0.0
      %54 = vst [vmem:[#allocation7 + $0x10] sm:$0xff] 0.0
      %55 = vst [vmem:[#allocation7 + $0x18] sm:$0xff] 0.0
      %56 = vst [vmem:[#allocation7 + $0x20] sm:$0xff] 0.0
      %57 = vst [vmem:[#allocation7 + $0x28] sm:$0xff] 0.0
      %58 = vst [vmem:[#allocation7 + $0x30] sm:$0xff] 0.0
      %59 = vst [vmem:[#allocation7 + $0x38] sm:$0xff] 0.0
    $region21: #{tpu_custom_call.1} parent=1 // pred_fallthru
      _
    %v60 = vld [vmem:[#allocation2] sm:$0xff]
    %v61 = vld [vmem:[#allocation2 + $0x8] sm:$0xff]
    %v62 = vld [vmem:[#allocation5] sm:$0xff]
    %v63 = vld [vmem:[#allocation5 + $0x8] sm:$0xff]
    %v64 = vlog2.pop %v60
    %v65 = vmul.f32 %v64, 0.6931472
    %v66 = vlog2.pop %v61
    %v67 = vmul.f32 %v66, 0.6931472
    %v68 = vmax.f32 %v65, -100.0
    %v69 = vmax.f32 %v67, -100.0
    %v70 = vsub.f32 1.0, %v60
    %v71 = vsub.f32 1.0, %v61
    %v72 = vlog2.pop %v70
    %v73 = vmul.f32 %v72, 0.6931472
    %v74 = vlog2.pop %v71
    %v75 = vmul.f32 %v74, 0.6931472
    %v76 = vmax.f32 %v73, -100.0
    %v77 = vmax.f32 %v75, -100.0
    %v78 = vsub.f32 %v68, %v76
    %v79 = vsub.f32 %v69, %v77
    %v80 = vmul.f32 %v62, %v78
    %v81 = vmul.f32 %v63, %v79
    %v82 = vadd.f32 %v76, %v80
    %v83 = vadd.f32 %v77, %v81
    %v84 = vsub.f32 0.0, %v82
    %v85 = vsub.f32 0.0, %v83
    %v86 = vmul.f32 %v60, %v62
    %v87 = vmul.f32 %v61, %v63
    %v88 = vld [vmem:[#allocation7] sm:$0xff]
    %v89 = vld [vmem:[#allocation7 + $0x8] sm:$0xff]
    %v90 = vadd.f32 %v88, %v84
    %v91 = vadd.f32 %v89, %v85
    %92 = vst [vmem:[#allocation7] sm:$0xff] %v90
    %93 = vst [vmem:[#allocation7 + $0x8] sm:$0xff] %v91
    %s94 = scalar_lea.vmem [#allocation7], 16
    %v95 = vld [vmem:[%s94] sm:$0xff]
    %v96 = vld [vmem:[%s94 + $0x8] sm:$0xff]
    %v97 = vadd.f32 %v95, %v86
    %v98 = vadd.f32 %v96, %v87
    %99 = vst [vmem:[%s94] sm:$0xff] %v97
    %100 = vst [vmem:[%s94 + $0x8] sm:$0xff] %v98
    %s101 = scalar_lea.vmem [#allocation7], 32
    %v102 = vld [vmem:[%s101] sm:$0xff]
    %v103 = vld [vmem:[%s101 + $0x8] sm:$0xff]
    %v104 = vadd.f32 %v102, %v60
    %v105 = vadd.f32 %v103, %v61
    %106 = vst [vmem:[%s101] sm:$0xff] %v104
    %107 = vst [vmem:[%s101 + $0x8] sm:$0xff] %v105
    %s108 = scalar_lea.vmem [#allocation7], 48
    %v109 = vld [vmem:[%s108] sm:$0xff]
    %v110 = vld [vmem:[%s108 + $0x8] sm:$0xff]
    %v111 = vadd.f32 %v109, %v62
    %v112 = vadd.f32 %v110, %v63
    %113 = vst [vmem:[%s108] sm:$0xff] %v111
    %114 = vst [vmem:[%s108 + $0x8] sm:$0xff] %v112
    // Predicated region
    $region22: #{tpu_custom_call.1} parent=1 // pred_check
      _
    $region23: #{tpu_custom_call.1} parent=1 // pred_check_branch
      %116 = sbr.rel (0) target = $region25
    $region24: #{tpu_custom_call.1} parent=1 // pred_region
      %s118 = ssub.s32 1024, 1024
      %119 = vsyncadd [#allocation4], %s118
      %s120 = sshll.u32 [#allocation7], 4
      %s121 = int_to_ptr.vmem [resolvable:$true] %s120
      %126 = dma.vmem_to_hbm [thread:$0]  %s121, 1024, %s2, [#allocation4], 256, 256, 16
    $region25: #{tpu_custom_call.1} parent=1 // pred_fallthru
      _
    // Predicated region
    $region26: #{tpu_custom_call.1} parent=1 // pred_check
      _
    $region27: #{tpu_custom_call.1} parent=1 // pred_check_branch
      %128 = sbr.rel (0) target = $region29
    $region28: #{tpu_custom_call.1} parent=1 // pred_region
      %129 = dma.done [#allocation4], 1024
    $region29: #{tpu_custom_call.1} parent=1 // pred_fallthru
      _
    %130 = vsyncpa [#allocation3], 1
    %131 = vsyncpa [#allocation6], 1
    %132 = vsyncpa [#allocation4], 1

</llo_original>
